<compile_context>
chip_gen: v7x
topology: tpu7x:2x2x1
jax: 0.10.0
libtpu: 0.0.40
codegen_flags: <defaults>
</compile_context>

<pallas_src>
import jax
import jax.numpy as jnp
from jax.experimental import pallas as pl
from jax.experimental.pallas import tpu as pltpu


def make_actor_kernel(act_limit: float):
    """Pallas kernel body closing over the scalar act_limit."""

    def kernel(obs_ref, w1_ref, b1_ref, w2_ref, b2_ref, w3_ref, b3_ref, out_ref):
        # obs tile: (TM, obs_dim). Upcast right after load so elementwise work
        # stays f32 even when obs is streamed as bf16 (v5e has no bf16 VPU/EUP).
        x = obs_ref[...].astype(jnp.float32)

        # Layer 1: (h1, TM) = W1 (h1, obs_dim) @ x^T  — contract over obs_dim.
        # Batch maps to lanes -> lane-dense activations from here on.
        h = jax.lax.dot_general(
            w1_ref[...], x,
            dimension_numbers=(((1,), (1,)), ((), ())),
            preferred_element_type=jnp.float32)
        h = jnp.tanh(h + b1_ref[...])                      # (h1, TM)

        # Layer 2: (h2, TM) = W2 (h2, h1) @ h
        h = jnp.dot(w2_ref[...], h, preferred_element_type=jnp.float32)
        h = jnp.tanh(h + b2_ref[...])                      # (h2, TM)

        # Output layer: (act_dim, TM), output_activation = Tanh, then act_limit.
        a = jnp.dot(w3_ref[...], h, preferred_element_type=jnp.float32)
        a = jnp.tanh(a + b3_ref[...]) * act_limit          # (act_dim, TM)

        # Lane-dense store: last dim is TM (>=128 or == full B).
        out_ref[...] = a.astype(out_ref.dtype)

    return kernel


def _round_up(x: int, m: int) -> int:
    return ((x + m - 1) // m) * m


def _pick_tm(B: int, tm_cap: int = 2048) -> int:
    """Row-tile size: large to amortize per-step overhead, but keep >= 2 grid
    steps for mid/large batches so v7x's two TensorCores both get work.
    For tiny batches, take the whole batch (block == full array dims)."""
    if B <= 256:
        return B
    tm = min(tm_cap, _round_up(-(-B // 2), 256))   # cdiv(B,2) rounded to 256
    return min(tm, B)


def mlp_actor_forward(obs, params, act_limit: float, *,
                      tm_cap: int = 2048, stream_dtype=None):
    """obs: (B, obs_dim). params: PyTorch (out, in)-layout weights, (out, 1) biases.

    Returns (B, act_dim) float32 actions in [-act_limit, act_limit].
    """
    B, obs_dim = obs.shape
    h1 = params["w1"].shape[0]
    h2 = params["w2"].shape[0]
    act_dim = params["w3"].shape[0]

    if stream_dtype is not None:
        # Halve HBM bytes on the dominant stream (v6e/v7x win); kernel upcasts.
        obs = obs.astype(stream_dtype)

    TM = _pick_tm(B, tm_cap)
    grid = (pl.cdiv(B, TM),)

    def resident(shape):
        # Same block every grid step -> DMA'd once, stays in VMEM (~6 KB total).
        return pl.BlockSpec(shape, lambda i: (0, 0))

    in_specs = [
        pl.BlockSpec((TM, obs_dim), lambda i: (i, 0)),   # obs streamed by row tile
        resident((h1, obs_dim)),                         # w1 (out, in)
        resident((h1, 1)),                               # b1
        resident((h2, h1)),                              # w2
        resident((h2, 1)),                               # b2
        resident((act_dim, h2)),                         # w3
        resident((act_dim, 1)),                          # b3
    ]
    # Transposed, lane-dense output: (act_dim, B) tiled along the lane axis.
    out_specs = pl.BlockSpec((act_dim, TM), lambda i: (0, i))

    flops = 2 * B * (obs_dim * h1 + h1 * h2 + h2 * act_dim)
    transcendentals = B * (h1 + h2 + act_dim)
    bytes_accessed = (
        int(obs.size) * obs.dtype.itemsize
        + B * act_dim * 4
        + sum(int(p.size) * 4 for p in params.values())
    )

    out_t = pl.pallas_call(
        make_actor_kernel(act_limit),
        out_shape=jax.ShapeDtypeStruct((act_dim, B), jnp.float32),
        grid=grid,
        in_specs=in_specs,
        out_specs=out_specs,
        compiler_params=pltpu.CompilerParams(
            # Batch axis is independent -> megacore-shardable (free ~2x on v7x).
            dimension_semantics=(pltpu.PARALLEL,),
        ),
        cost_estimate=pl.CostEstimate(
            flops=flops,
            transcendentals=transcendentals,
            bytes_accessed=bytes_accessed,
        ),
    )(
        obs,
        params["w1"], params["b1"],
        params["w2"], params["b2"],
        params["w3"], params["b3"],
    )

    # Tiny un-transpose (B*act_dim elements) back to the PyTorch output layout.
    return out_t.T


def init_params(key, obs_dim, hidden_sizes, act_dim):
    """Deterministic synthetic init in PyTorch (out, in) layout; biases (out, 1)."""
    h1, h2 = hidden_sizes
    k1, k2, k3, k4, k5, k6 = jax.random.split(key, 6)
    ws, bs = 0.1, 0.05
    return {
        "w1": ws * jax.random.normal(k1, (h1, obs_dim), jnp.float32),
        "b1": bs * jax.random.normal(k4, (h1, 1), jnp.float32),
        "w2": ws * jax.random.normal(k2, (h2, h1), jnp.float32),
        "b2": bs * jax.random.normal(k5, (h2, 1), jnp.float32),
        "w3": ws * jax.random.normal(k3, (act_dim, h2), jnp.float32),
        "b3": bs * jax.random.normal(k6, (act_dim, 1), jnp.float32),
    }


def reference_forward(obs, params, act_limit):
    """Pure-JAX reference of the same math (PyTorch x @ W.T + b semantics)."""
    h = jnp.tanh(obs @ params["w1"].T + params["b1"].T)
    h = jnp.tanh(h @ params["w2"].T + params["b2"].T)
    return jnp.tanh(h @ params["w3"].T + params["b3"].T) * act_limit


if __name__ == "__main__":
    # Shapes consistent with the module:
    # obs_dim=16, hidden_sizes=[32, 32], act_dim=4, act_limit=2.0, batch=8
    B, obs_dim, act_dim = 8, 16, 4
    hidden_sizes = [32, 32]
    act_limit = 2.0

    key = jax.random.PRNGKey(0)
    k_obs, k_params, k_big = jax.random.split(key, 3)
    params = init_params(k_params, obs_dim, hidden_sizes, act_dim)

    # 1) Small-batch check (grid of 1, whole batch in one tile).
    obs = jax.random.normal(k_obs, (B, obs_dim), jnp.float32)
    out = jax.block_until_ready(mlp_actor_forward(obs, params, act_limit))
    ref = reference_forward(obs, params, act_limit)
    assert out.shape == (B, act_dim)
    assert jnp.allclose(out, ref, atol=1e-5, rtol=1e-5)

    # 2) Larger batch exercising the tiled path (TM=512, grid=2, partial-free).
    B_big = 1024
    obs_big = jax.random.normal(k_big, (B_big, obs_dim), jnp.float32)
    out_big = jax.block_until_ready(mlp_actor_forward(obs_big, params, act_limit))
    ref_big = reference_forward(obs_big, params, act_limit)
    assert out_big.shape == (B_big, act_dim)
    assert jnp.allclose(out_big, ref_big, atol=1e-5, rtol=1e-5)

    # 3) Ragged batch (partial last tile is masked on writeback).
    B_rag = 300  # TM=256, grid=2, last tile has 44 valid rows
    obs_rag = jax.random.normal(k_big, (B_rag, obs_dim), jnp.float32)
    out_rag = jax.block_until_ready(mlp_actor_forward(obs_rag, params, act_limit))
    ref_rag = reference_forward(obs_rag, params, act_limit)
    assert out_rag.shape == (B_rag, act_dim)
    assert jnp.allclose(out_rag, ref_rag, atol=1e-5, rtol=1e-5)

    # 4) bf16 streaming of obs (v6e/v7x HBM win); kernel upcasts to f32, so the
    #    reference with identically-rounded obs matches tightly.
    out_bf16 = jax.block_until_ready(
        mlp_actor_forward(obs_big, params, act_limit, stream_dtype=jnp.bfloat16))
    ref_bf16 = reference_forward(
        obs_big.astype(jnp.bfloat16).astype(jnp.float32), params, act_limit)
    assert jnp.allclose(out_bf16, ref_bf16, atol=1e-4, rtol=1e-4)

    print("KERNEL_OK")
</pallas_src>

<mosaic_0001>
module attributes {stable_mosaic.version = 11 : i64} {
  func.func @kernel(%arg0: i32, %arg1: memref<8x16xf32, #tpu.memory_space<vmem>>, %arg2: memref<32x16xf32, #tpu.memory_space<vmem>>, %arg3: memref<32x1xf32, #tpu.memory_space<vmem>>, %arg4: memref<32x32xf32, #tpu.memory_space<vmem>>, %arg5: memref<32x1xf32, #tpu.memory_space<vmem>>, %arg6: memref<4x32xf32, #tpu.memory_space<vmem>>, %arg7: memref<4x1xf32, #tpu.memory_space<vmem>>, %arg8: memref<4x8xf32, #tpu.memory_space<vmem>>) attributes {dimension_semantics = [#tpu.dimension_semantics<parallel>], iteration_bounds = array<i64: 1>, scalar_prefetch = 0 : i64, scratch_operands = 0 : i64, tpu.core_type = #tpu.core_type<tc>, window_params = [{transform_indices = @transform_0, window_bounds = array<i64: 8, 16>}, {pipeline_mode = #tpu.pipeline_mode<synchronous>, transform_indices = @transform_1, window_bounds = array<i64: 32, 16>}, {pipeline_mode = #tpu.pipeline_mode<synchronous>, transform_indices = @transform_2, window_bounds = array<i64: 32, 1>}, {pipeline_mode = #tpu.pipeline_mode<synchronous>, transform_indices = @transform_3, window_bounds = array<i64: 32, 32>}, {pipeline_mode = #tpu.pipeline_mode<synchronous>, transform_indices = @transform_4, window_bounds = array<i64: 32, 1>}, {pipeline_mode = #tpu.pipeline_mode<synchronous>, transform_indices = @transform_5, window_bounds = array<i64: 4, 32>}, {pipeline_mode = #tpu.pipeline_mode<synchronous>, transform_indices = @transform_6, window_bounds = array<i64: 4, 1>}, {transform_indices = @transform_7, window_bounds = array<i64: 4, 8>}]} {
    %c0 = arith.constant 0 : index
    %c0_0 = arith.constant 0 : index
    %0 = vector.load %arg1[%c0, %c0_0] : memref<8x16xf32, #tpu.memory_space<vmem>>, vector<8x16xf32>
    %c0_1 = arith.constant 0 : index
    %c0_2 = arith.constant 0 : index
    %1 = vector.load %arg2[%c0_1, %c0_2] : memref<32x16xf32, #tpu.memory_space<vmem>>, vector<32x16xf32>
    %cst = arith.constant dense<0.000000e+00> : vector<32x8xf32>
    %2 = tpu.matmul %1, %0, %cst {dimension_numbers = #tpu.dot_dimension_numbers<[1], [1], [0], [0], [0, 0, 1, 0], [], []>} : vector<32x16xf32>, vector<8x16xf32>, vector<32x8xf32> -> vector<32x8xf32>
    %c0_3 = arith.constant 0 : index
    %c0_4 = arith.constant 0 : index
    %3 = vector.load %arg3[%c0_3, %c0_4] : memref<32x1xf32, #tpu.memory_space<vmem>>, vector<32x1xf32>
    %4 = vector.broadcast %3 : vector<32x1xf32> to vector<32x8xf32>
    %5 = arith.addf %2, %4 : vector<32x8xf32>
    %6 = math.tanh %5 : vector<32x8xf32>
    %c0_5 = arith.constant 0 : index
    %c0_6 = arith.constant 0 : index
    %7 = vector.load %arg4[%c0_5, %c0_6] : memref<32x32xf32, #tpu.memory_space<vmem>>, vector<32x32xf32>
    %cst_7 = arith.constant dense<0.000000e+00> : vector<32x8xf32>
    %8 = tpu.matmul %7, %6, %cst_7 {dimension_numbers = #tpu.dot_dimension_numbers<[1], [0], [0], [1], [0, 0, 1, 1], [], []>} : vector<32x32xf32>, vector<32x8xf32>, vector<32x8xf32> -> vector<32x8xf32>
    %c0_8 = arith.constant 0 : index
    %c0_9 = arith.constant 0 : index
    %9 = vector.load %arg5[%c0_8, %c0_9] : memref<32x1xf32, #tpu.memory_space<vmem>>, vector<32x1xf32>
    %10 = vector.broadcast %9 : vector<32x1xf32> to vector<32x8xf32>
    %11 = arith.addf %8, %10 : vector<32x8xf32>
    %12 = math.tanh %11 : vector<32x8xf32>
    %c0_10 = arith.constant 0 : index
    %c0_11 = arith.constant 0 : index
    %13 = vector.load %arg6[%c0_10, %c0_11] : memref<4x32xf32, #tpu.memory_space<vmem>>, vector<4x32xf32>
    %cst_12 = arith.constant dense<0.000000e+00> : vector<4x8xf32>
    %14 = tpu.matmul %13, %12, %cst_12 {dimension_numbers = #tpu.dot_dimension_numbers<[1], [0], [0], [1], [0, 0, 1, 1], [], []>} : vector<4x32xf32>, vector<32x8xf32>, vector<4x8xf32> -> vector<4x8xf32>
    %c0_13 = arith.constant 0 : index
    %c0_14 = arith.constant 0 : index
    %15 = vector.load %arg7[%c0_13, %c0_14] : memref<4x1xf32, #tpu.memory_space<vmem>>, vector<4x1xf32>
    %16 = vector.broadcast %15 : vector<4x1xf32> to vector<4x8xf32>
    %17 = arith.addf %14, %16 : vector<4x8xf32>
    %18 = math.tanh %17 : vector<4x8xf32>
    %cst_15 = arith.constant 2.000000e+00 : f32
    %19 = vector.broadcast %cst_15 : f32 to vector<4x8xf32>
    %20 = arith.mulf %18, %19 : vector<4x8xf32>
    %c0_16 = arith.constant 0 : index
    %c0_17 = arith.constant 0 : index
    %21 = vector.load %arg8[%c0_16, %c0_17] : memref<4x8xf32, #tpu.memory_space<vmem>>, vector<4x8xf32>
    tpu.vector_store %arg8[%c0_16, %c0_17], %20 {strides = array<i32>} : memref<4x8xf32, #tpu.memory_space<vmem>>, vector<4x8xf32>,
    return
  }
  func.func @transform_0(%arg0: i32) -> (i32, i32) {
    %c0_i32 = arith.constant 0 : i32
    %c0_i32_0 = arith.constant 0 : i32
    return %arg0, %c0_i32 : i32, i32
  }
  func.func @transform_1(%arg0: i32) -> (i32, i32) {
    %c0_i32 = arith.constant 0 : i32
    %c0_i32_0 = arith.constant 0 : i32
    %c0_i32_1 = arith.constant 0 : i32
    return %c0_i32, %c0_i32_0 : i32, i32
  }
  func.func @transform_2(%arg0: i32) -> (i32, i32) {
    %c0_i32 = arith.constant 0 : i32
    %c0_i32_0 = arith.constant 0 : i32
    %c0_i32_1 = arith.constant 0 : i32
    return %c0_i32, %c0_i32_0 : i32, i32
  }
  func.func @transform_3(%arg0: i32) -> (i32, i32) {
    %c0_i32 = arith.constant 0 : i32
    %c0_i32_0 = arith.constant 0 : i32
    %c0_i32_1 = arith.constant 0 : i32
    return %c0_i32, %c0_i32_0 : i32, i32
  }
  func.func @transform_4(%arg0: i32) -> (i32, i32) {
    %c0_i32 = arith.constant 0 : i32
    %c0_i32_0 = arith.constant 0 : i32
    %c0_i32_1 = arith.constant 0 : i32
    return %c0_i32, %c0_i32_0 : i32, i32
  }
  func.func @transform_5(%arg0: i32) -> (i32, i32) {
    %c0_i32 = arith.constant 0 : i32
    %c0_i32_0 = arith.constant 0 : i32
    %c0_i32_1 = arith.constant 0 : i32
    return %c0_i32, %c0_i32_0 : i32, i32
  }
  func.func @transform_6(%arg0: i32) -> (i32, i32) {
    %c0_i32 = arith.constant 0 : i32
    %c0_i32_0 = arith.constant 0 : i32
    %c0_i32_1 = arith.constant 0 : i32
    return %c0_i32, %c0_i32_0 : i32, i32
  }
  func.func @transform_7(%arg0: i32) -> (i32, i32) {
    %c0_i32 = arith.constant 0 : i32
    %c0_i32_0 = arith.constant 0 : i32
    return %c0_i32, %arg0 : i32, i32
  }
}

</mosaic_0001>

<llo_original>
// kernel: tpu_custom_call.1
$region0: #{tpu_custom_call.1}
  #allocation0 [shape = 'u32[]', space=smem, size = 0x4, offset = 0x4, fixed_abs, tag = 'smem constant byte address 0x4 - core index']
  #allocation1 [shape = 'u32[144,128]{1,0:T(1,128)}', space=vmem, size = 0x12000, scoped, tag = 'internal scratch']
  %s0 = inlined_call_operand.vmem [shape: f32[8,16], index: 0, kind: input, shape index: {}]
  %s1 = inlined_call_operand.vmem [shape: f32[32,16], index: 1, kind: input, shape index: {}]
  %s2 = inlined_call_operand.vmem [shape: f32[32,1], index: 2, kind: input, shape index: {}]
  %s3 = inlined_call_operand.vmem [shape: f32[32,32], index: 3, kind: input, shape index: {}]
  %s4 = inlined_call_operand.vmem [shape: f32[32,1], index: 4, kind: input, shape index: {}]
  %s5 = inlined_call_operand.vmem [shape: f32[4,32], index: 5, kind: input, shape index: {}]
  %s6 = inlined_call_operand.vmem [shape: f32[4,1], index: 6, kind: input, shape index: {}]
  %s7 = inlined_call_operand.hbm [shape: f32[4,8], index: 7, kind: output, shape index: {}]
  %s8 = sld [smem:[#allocation0]]
  $region38: #{tpu_custom_call.1} parent=0
    _
  %s10 = ssub.s32 1, %s8
  %s11 = scalar_select 0, %s10, %s8
  $region1: #{tpu_custom_call.1} parent=0
    #allocation2 [shape = 'u8[2048]{0}', space=vmem, size = 0x800, scoped, tag = 'output window, operand 0, single buffered']
    #allocation3 [shape = 's32[1]{0}', space=sflag, size = 0x4, scoped, tag = 'scoped memory for tpu_custom_call.1']
    %12 = vsyncpa [#allocation3], 0
    // Predicated region
    $region2: #{tpu_custom_call.1} parent=1 // pred_check
      _
    $region3: #{tpu_custom_call.1} parent=1 // pred_check_branch
      %14 = sbr.rel (0) target = $region5
    $region4: #{tpu_custom_call.1} parent=1 // pred_region
      _
    $region5: #{tpu_custom_call.1} parent=1 // pred_fallthru
      _
    // Predicated region
    $region6: #{tpu_custom_call.1} parent=1 // pred_check
      _
    $region7: #{tpu_custom_call.1} parent=1 // pred_check_branch
      %16 = sbr.rel (0) target = $region9
    $region8: #{tpu_custom_call.1} parent=1 // pred_region
      _
    $region9: #{tpu_custom_call.1} parent=1 // pred_fallthru
      _
    // Predicated region
    $region10: #{tpu_custom_call.1} parent=1 // pred_check
      _
    $region11: #{tpu_custom_call.1} parent=1 // pred_check_branch
      %18 = sbr.rel (0) target = $region13
    $region12: #{tpu_custom_call.1} parent=1 // pred_region
      _
    $region13: #{tpu_custom_call.1} parent=1 // pred_fallthru
      _
    // Predicated region
    $region14: #{tpu_custom_call.1} parent=1 // pred_check
      _
    $region15: #{tpu_custom_call.1} parent=1 // pred_check_branch
      %20 = sbr.rel (0) target = $region17
    $region16: #{tpu_custom_call.1} parent=1 // pred_region
      _
    $region17: #{tpu_custom_call.1} parent=1 // pred_fallthru
      _
    // Predicated region
    $region18: #{tpu_custom_call.1} parent=1 // pred_check
      _
    $region19: #{tpu_custom_call.1} parent=1 // pred_check_branch
      %22 = sbr.rel (0) target = $region21
    $region20: #{tpu_custom_call.1} parent=1 // pred_region
      _
    $region21: #{tpu_custom_call.1} parent=1 // pred_fallthru
      _
    // Predicated region
    $region22: #{tpu_custom_call.1} parent=1 // pred_check
      _
    $region23: #{tpu_custom_call.1} parent=1 // pred_check_branch
      %24 = sbr.rel (0) target = $region25
    $region24: #{tpu_custom_call.1} parent=1 // pred_region
      _
    $region25: #{tpu_custom_call.1} parent=1 // pred_fallthru
      _
    // Predicated region
    $region26: #{tpu_custom_call.1} parent=1 // pred_check
      _
    $region27: #{tpu_custom_call.1} parent=1 // pred_check_branch
      %26 = sbr.rel (0) target = $region29
    $region28: #{tpu_custom_call.1} parent=1 // pred_region
      _
    $region29: #{tpu_custom_call.1} parent=1 // pred_fallthru
      _
    %v27 = vld [vmem:[%s0] sm:$0xff]
    %v28 = vld [vmem:[%s1] sm:$0xff]
    %v29 = vld [vmem:[%s1 + $0x8] sm:$0xff]
    %v30 = vld [vmem:[%s1 + $0x10] sm:$0xff]
    %v31 = vld [vmem:[%s1 + $0x18] sm:$0xff]
    %v32 = vld [vmem:[%s2] sm:$0xff]
    %v33 = vld [vmem:[%s2 + $0x8] sm:$0xff]
    %v34 = vld [vmem:[%s2 + $0x10] sm:$0xff]
    %v35 = vld [vmem:[%s2 + $0x18] sm:$0xff]
    %37 = vset.pattern.permute.xlu0 0
    %38 = vperm.xlu0 %37, %v32
    %v39 = vpop.permute.xlu0 %38
    %42 = vset.pattern.permute.xlu0 0
    %43 = vperm.xlu0 %42, %v33
    %v44 = vpop.permute.xlu0 %43
    %47 = vset.pattern.permute.xlu0 0
    %48 = vperm.xlu0 %47, %v34
    %v49 = vpop.permute.xlu0 %48
    %52 = vset.pattern.permute.xlu0 0
    %53 = vperm.xlu0 %52, %v35
    %v54 = vpop.permute.xlu0 %53
    %vm56 = vcmask 130048
    %v58 = vsel %vm56, %v28, 0
    %v61 = vsel %vm56, %v29, 0
    %v64 = vsel %vm56, %v30, 0
    %v67 = vsel %vm56, %v31, 0
    %v70 = vsel %vm56, %v27, 0
    %72 = vmatprep.subr.mxu0 0.0
    %73 = vmatpush1.xpose.msra.mxu0 %v70
    %74 = vmatprep.subr.mxu0 0.0
    %75 = vmatpush1.xpose.msra.mxu0 0.0
    %76 = vmatprep.subr.mxu0 0.0
    %77 = vmatpush1.xpose.msra.mxu0 0.0
    %78 = vmatprep.subr.mxu0 0.0
    %79 = vmatpush1.xpose.msra.mxu0 0.0
    %80 = vmatprep.subr.mxu0 0.0
    %81 = vmatpush1.xpose.msra.mxu0 0.0
    %82 = vmatprep.subr.mxu0 0.0
    %83 = vmatpush1.xpose.msra.mxu0 0.0
    %84 = vmatprep.subr.mxu0 0.0
    %85 = vmatpush1.xpose.msra.mxu0 0.0
    %86 = vmatprep.subr.mxu0 0.0
    %87 = vmatpush1.xpose.msra.mxu0 0.0
    %88 = vmatprep.subr.mxu0 0.0
    %89 = vmatpush1.xpose.msra.mxu0 0.0
    %90 = vmatprep.subr.mxu0 0.0
    %91 = vmatpush1.xpose.msra.mxu0 0.0
    %92 = vmatprep.subr.mxu0 0.0
    %93 = vmatpush1.xpose.msra.mxu0 0.0
    %94 = vmatprep.subr.mxu0 0.0
    %95 = vmatpush1.xpose.msra.mxu0 0.0
    %96 = vmatprep.subr.mxu0 0.0
    %97 = vmatpush1.xpose.msra.mxu0 0.0
    %98 = vmatprep.subr.mxu0 0.0
    %99 = vmatpush1.xpose.msra.mxu0 0.0
    %100 = vmatprep.subr.mxu0 0.0
    %101 = vmatpush1.xpose.msra.mxu0 0.0
    %102 = vmatprep.subr.mxu0 0.0
    %103 = vmatpush1.xpose.msra.mxu0 0.0
    %104 = vmatprep.subr.mxu0 0.0
    %105 = vmatpush1.xpose.msra.mxu0 0.0
    %106 = vmatprep.subr.mxu0 0.0
    %107 = vmatpush1.xpose.msra.mxu0 0.0
    %108 = vmatprep.subr.mxu0 0.0
    %109 = vmatpush1.xpose.msra.mxu0 0.0
    %110 = vmatprep.subr.mxu0 0.0
    %111 = vmatpush1.xpose.msra.mxu0 0.0
    %112 = vmatprep.subr.mxu0 0.0
    %113 = vmatpush1.xpose.msra.mxu0 0.0
    %114 = vmatprep.subr.mxu0 0.0
    %115 = vmatpush1.xpose.msra.mxu0 0.0
    %116 = vmatprep.subr.mxu0 0.0
    %117 = vmatpush1.xpose.msra.mxu0 0.0
    %118 = vmatprep.subr.mxu0 0.0
    %119 = vmatpush1.xpose.msra.mxu0 0.0
    %120 = vmatprep.subr.mxu0 0.0
    %121 = vmatpush1.xpose.msra.mxu0 0.0
    %122 = vmatprep.subr.mxu0 0.0
    %123 = vmatpush1.xpose.msra.mxu0 0.0
    %124 = vmatprep.subr.mxu0 0.0
    %125 = vmatpush1.xpose.msra.mxu0 0.0
    %126 = vmatprep.subr.mxu0 0.0
    %127 = vmatpush1.xpose.msra.mxu0 0.0
    %128 = vmatprep.subr.mxu0 0.0
    %129 = vmatpush1.xpose.msra.mxu0 0.0
    %130 = vmatprep.subr.mxu0 0.0
    %131 = vmatpush1.xpose.msra.mxu0 0.0
    %132 = vmatprep.subr.mxu0 0.0
    %133 = vmatpush1.xpose.msra.mxu0 0.0
    %134 = vmatprep.subr.mxu0 0.0
    %135 = vmatpush1.xpose.msra.mxu0 0.0
    %136 = vmatprep.mubr.f32.mxu0 0.0
    %137 = vmatmul.mubr.f32.gmra.mrb[0].mxu0 %v58
    %v138 = vpop.f32.mrb[0].mxu0
    %v139 = vadd.f32 %v39, %v138
    %v140 = vpop.f32.mrb[0].mxu0
    %141 = vmatprep.mubr.f32.mxu0 0.0
    %142 = vmatmul.mubr.f32.gmra.mrb[0].mxu0 %v61
    %v143 = vpop.f32.mrb[0].mxu0
    %v144 = vadd.f32 %v44, %v143
    %v145 = vpop.f32.mrb[0].mxu0
    %146 = vmatprep.mubr.f32.mxu0 0.0
    %147 = vmatmul.mubr.f32.gmra.mrb[0].mxu0 %v64
    %v148 = vpop.f32.mrb[0].mxu0
    %v149 = vadd.f32 %v49, %v148
    %v150 = vpop.f32.mrb[0].mxu0
    %151 = vmatprep.mubr.f32.mxu0 0.0
    %152 = vmatmul.mubr.f32.gmra.mrb[0].mxu0 %v67
    %v153 = vpop.f32.mrb[0].mxu0
    %v154 = vadd.f32 %v54, %v153
    %v155 = vpop.f32.mrb[0].mxu0
    %156 = vdwg.mxu0
    %v157 = vtanh.pop %v139
    %v158 = vtanh.pop %v144
    %v159 = vtanh.pop %v149
    %v160 = vtanh.pop %v154
    %v161 = vld [vmem:[%s3] sm:$0xff]
    %v162 = vld [vmem:[%s3 + $0x8] sm:$0xff]
    %v163 = vld [vmem:[%s3 + $0x10] sm:$0xff]
    %v164 = vld [vmem:[%s3 + $0x18] sm:$0xff]
    %v165 = vld [vmem:[%s4] sm:$0xff]
    %v166 = vld [vmem:[%s4 + $0x8] sm:$0xff]
    %v167 = vld [vmem:[%s4 + $0x10] sm:$0xff]
    %v168 = vld [vmem:[%s4 + $0x18] sm:$0xff]
    %170 = vset.pattern.permute.xlu0 0
    %171 = vperm.xlu0 %170, %v165
    %v172 = vpop.permute.xlu0 %171
    %175 = vset.pattern.permute.xlu0 0
    %176 = vperm.xlu0 %175, %v166
    %v177 = vpop.permute.xlu0 %176
    %180 = vset.pattern.permute.xlu0 0
    %181 = vperm.xlu0 %180, %v167
    %v182 = vpop.permute.xlu0 %181
    %185 = vset.pattern.permute.xlu0 0
    %186 = vperm.xlu0 %185, %v168
    %v187 = vpop.permute.xlu0 %186
    %vm189 = vcmask 261120
    %v191 = vsel %vm189, %v161, 0
    %v194 = vsel %vm189, %v162, 0
    %v197 = vsel %vm189, %v163, 0
    %v200 = vsel %vm189, %v164, 0
    %202 = vmatprep.subr.mxu0 0.0
    %203 = vmatpush1.msra.mxu0 %v157
    %204 = vmatprep.subr.mxu0 0.0
    %205 = vmatpush1.msra.mxu0 %v158
    %206 = vmatprep.subr.mxu0 0.0
    %207 = vmatpush1.msra.mxu0 %v159
    %208 = vmatprep.subr.mxu0 0.0
    %209 = vmatpush1.msra.mxu0 %v160
    %210 = vmatprep.subr.mxu0 0.0
    %211 = vmatpush1.msra.mxu0 0.0
    %212 = vmatprep.subr.mxu0 0.0
    %213 = vmatpush1.msra.mxu0 0.0
    %214 = vmatprep.subr.mxu0 0.0
    %215 = vmatpush1.msra.mxu0 0.0
    %216 = vmatprep.subr.mxu0 0.0
    %217 = vmatpush1.msra.mxu0 0.0
    %218 = vmatprep.subr.mxu0 0.0
    %219 = vmatpush1.msra.mxu0 0.0
    %220 = vmatprep.subr.mxu0 0.0
    %221 = vmatpush1.msra.mxu0 0.0
    %222 = vmatprep.subr.mxu0 0.0
    %223 = vmatpush1.msra.mxu0 0.0
    %224 = vmatprep.subr.mxu0 0.0
    %225 = vmatpush1.msra.mxu0 0.0
    %226 = vmatprep.subr.mxu0 0.0
    %227 = vmatpush1.msra.mxu0 0.0
    %228 = vmatprep.subr.mxu0 0.0
    %229 = vmatpush1.msra.mxu0 0.0
    %230 = vmatprep.subr.mxu0 0.0
    %231 = vmatpush1.msra.mxu0 0.0
    %232 = vmatprep.subr.mxu0 0.0
    %233 = vmatpush1.msra.mxu0 0.0
    %234 = vmatprep.subr.mxu0 0.0
    %235 = vmatpush1.msra.mxu0 0.0
    %236 = vmatprep.subr.mxu0 0.0
    %237 = vmatpush1.msra.mxu0 0.0
    %238 = vmatprep.subr.mxu0 0.0
    %239 = vmatpush1.msra.mxu0 0.0
    %240 = vmatprep.subr.mxu0 0.0
    %241 = vmatpush1.msra.mxu0 0.0
    %242 = vmatprep.subr.mxu0 0.0
    %243 = vmatpush1.msra.mxu0 0.0
    %244 = vmatprep.subr.mxu0 0.0
    %245 = vmatpush1.msra.mxu0 0.0
    %246 = vmatprep.subr.mxu0 0.0
    %247 = vmatpush1.msra.mxu0 0.0
    %248 = vmatprep.subr.mxu0 0.0
    %249 = vmatpush1.msra.mxu0 0.0
    %250 = vmatprep.subr.mxu0 0.0
    %251 = vmatpush1.msra.mxu0 0.0
    %252 = vmatprep.subr.mxu0 0.0
    %253 = vmatpush1.msra.mxu0 0.0
    %254 = vmatprep.subr.mxu0 0.0
    %255 = vmatpush1.msra.mxu0 0.0
    %256 = vmatprep.subr.mxu0 0.0
    %257 = vmatpush1.msra.mxu0 0.0
    %258 = vmatprep.subr.mxu0 0.0
    %259 = vmatpush1.msra.mxu0 0.0
    %260 = vmatprep.subr.mxu0 0.0
    %261 = vmatpush1.msra.mxu0 0.0
    %262 = vmatprep.subr.mxu0 0.0
    %263 = vmatpush1.msra.mxu0 0.0
    %264 = vmatprep.subr.mxu0 0.0
    %265 = vmatpush1.msra.mxu0 0.0
    %266 = vmatprep.mubr.f32.mxu0 0.0
    %267 = vmatmul.mubr.f32.gmra.mrb[0].mxu0 %v191
    %v268 = vpop.f32.mrb[0].mxu0
    %v269 = vadd.f32 %v172, %v268
    %v270 = vpop.f32.mrb[0].mxu0
    %271 = vmatprep.mubr.f32.mxu0 0.0
    %272 = vmatmul.mubr.f32.gmra.mrb[0].mxu0 %v194
    %v273 = vpop.f32.mrb[0].mxu0
    %v274 = vadd.f32 %v177, %v273
    %v275 = vpop.f32.mrb[0].mxu0
    %276 = vmatprep.mubr.f32.mxu0 0.0
    %277 = vmatmul.mubr.f32.gmra.mrb[0].mxu0 %v197
    %v278 = vpop.f32.mrb[0].mxu0
    %v279 = vadd.f32 %v182, %v278
    %v280 = vpop.f32.mrb[0].mxu0
    %281 = vmatprep.mubr.f32.mxu0 0.0
    %282 = vmatmul.mubr.f32.gmra.mrb[0].mxu0 %v200
    %v283 = vpop.f32.mrb[0].mxu0
    %v284 = vadd.f32 %v187, %v283
    %v285 = vpop.f32.mrb[0].mxu0
    %286 = vdwg.mxu0
    %v287 = vtanh.pop %v269
    %v288 = vtanh.pop %v274
    %v289 = vtanh.pop %v279
    %v290 = vtanh.pop %v284
    %v291 = vld [vmem:[%s5] sm:$0xf]
    %v292 = vld [vmem:[%s6] sm:$0xf]
    %294 = vset.pattern.permute.xlu0 0
    %295 = vperm.xlu0 %294, %v292
    %v296 = vpop.permute.xlu0 %295
    %v299 = vsel %vm189, %v291, 0
    %301 = vmatprep.subr.mxu0 0.0
    %302 = vmatpush1.msra.mxu0 %v287
    %303 = vmatprep.subr.mxu0 0.0
    %304 = vmatpush1.msra.mxu0 %v288
    %305 = vmatprep.subr.mxu0 0.0
    %306 = vmatpush1.msra.mxu0 %v289
    %307 = vmatprep.subr.mxu0 0.0
    %308 = vmatpush1.msra.mxu0 %v290
    %309 = vmatprep.subr.mxu0 0.0
    %310 = vmatpush1.msra.mxu0 0.0
    %311 = vmatprep.subr.mxu0 0.0
    %312 = vmatpush1.msra.mxu0 0.0
    %313 = vmatprep.subr.mxu0 0.0
    %314 = vmatpush1.msra.mxu0 0.0
    %315 = vmatprep.subr.mxu0 0.0
    %316 = vmatpush1.msra.mxu0 0.0
    %317 = vmatprep.subr.mxu0 0.0
    %318 = vmatpush1.msra.mxu0 0.0
    %319 = vmatprep.subr.mxu0 0.0
    %320 = vmatpush1.msra.mxu0 0.0
    %321 = vmatprep.subr.mxu0 0.0
    %322 = vmatpush1.msra.mxu0 0.0
    %323 = vmatprep.subr.mxu0 0.0
    %324 = vmatpush1.msra.mxu0 0.0
    %325 = vmatprep.subr.mxu0 0.0
    %326 = vmatpush1.msra.mxu0 0.0
    %327 = vmatprep.subr.mxu0 0.0
    %328 = vmatpush1.msra.mxu0 0.0
    %329 = vmatprep.subr.mxu0 0.0
    %330 = vmatpush1.msra.mxu0 0.0
    %331 = vmatprep.subr.mxu0 0.0
    %332 = vmatpush1.msra.mxu0 0.0
    %333 = vmatprep.subr.mxu0 0.0
    %334 = vmatpush1.msra.mxu0 0.0
    %335 = vmatprep.subr.mxu0 0.0
    %336 = vmatpush1.msra.mxu0 0.0
    %337 = vmatprep.subr.mxu0 0.0
    %338 = vmatpush1.msra.mxu0 0.0
    %339 = vmatprep.subr.mxu0 0.0
    %340 = vmatpush1.msra.mxu0 0.0
    %341 = vmatprep.subr.mxu0 0.0
    %342 = vmatpush1.msra.mxu0 0.0
    %343 = vmatprep.subr.mxu0 0.0
    %344 = vmatpush1.msra.mxu0 0.0
    %345 = vmatprep.subr.mxu0 0.0
    %346 = vmatpush1.msra.mxu0 0.0
    %347 = vmatprep.subr.mxu0 0.0
    %348 = vmatpush1.msra.mxu0 0.0
    %349 = vmatprep.subr.mxu0 0.0
    %350 = vmatpush1.msra.mxu0 0.0
    %351 = vmatprep.subr.mxu0 0.0
    %352 = vmatpush1.msra.mxu0 0.0
    %353 = vmatprep.subr.mxu0 0.0
    %354 = vmatpush1.msra.mxu0 0.0
    %355 = vmatprep.subr.mxu0 0.0
    %356 = vmatpush1.msra.mxu0 0.0
    %357 = vmatprep.subr.mxu0 0.0
    %358 = vmatpush1.msra.mxu0 0.0
    %359 = vmatprep.subr.mxu0 0.0
    %360 = vmatpush1.msra.mxu0 0.0
    %361 = vmatprep.subr.mxu0 0.0
    %362 = vmatpush1.msra.mxu0 0.0
    %363 = vmatprep.subr.mxu0 0.0
    %364 = vmatpush1.msra.mxu0 0.0
    %365 = vmatprep.mubr.f32.mxu0 0.0
    %366 = vmatmul.mubr.f32.gmra.mrb[0].mxu0 %v299
    %v367 = vpop.f32.mrb[0].mxu0
    %v368 = vadd.f32 %v296, %v367
    %v369 = vpop.f32.mrb[0].mxu0
    %370 = vdwg.mxu0
    %v371 = vtanh.pop %v368
    %v372 = vmul.f32 %v371, 2.0
    %vm373 = vcmask 60416
    %374 = vst.msk [vmem:[#allocation2] sm:$0xf] %vm373, %v372
    // Predicated region
    $region30: #{tpu_custom_call.1} parent=1 // pred_check
      _
    $region31: #{tpu_custom_call.1} parent=1 // pred_check_branch
      %376 = sbr.rel (0) target = $region33
    $region32: #{tpu_custom_call.1} parent=1 // pred_region
      %s378 = ssub.s32 64, 64
      %379 = vsyncadd [#allocation3], %s378
      %s381 = sshll.u32 [#allocation2], 4
      %s382 = int_to_ptr.vmem [resolvable:$true] %s381
      %384 = dma.vmem_to_hbm [thread:$0]  %s382, 64, %s7, [#allocation3]
    $region33: #{tpu_custom_call.1} parent=1 // pred_fallthru
      _
    // Predicated region
    $region34: #{tpu_custom_call.1} parent=1 // pred_check
      _
    $region35: #{tpu_custom_call.1} parent=1 // pred_check_branch
      %386 = sbr.rel (0) target = $region37
    $region36: #{tpu_custom_call.1} parent=1 // pred_region
      %387 = dma.done [#allocation3], 64
    $region37: #{tpu_custom_call.1} parent=1 // pred_fallthru
      _
    %388 = vsyncpa [#allocation3], 1

</llo_original>
